<compile_context>
chip_gen: v7x
topology: tpu7x:2x2x1
jax: 0.10.0
libtpu: 0.0.40
codegen_flags: <defaults>
</compile_context>

<pallas_src>
import jax
import jax.numpy as jnp
from jax.experimental import pallas as pl
from jax.experimental.pallas import tpu as pltpu


def _pick_tile(dim, cap):
    """Largest tile <= cap that divides `dim` and is a multiple of 16,
    falling back to the full dim (always a legal block)."""
    if dim <= cap:
        return dim
    t = cap
    while t >= 16:
        if dim % t == 0:
            return t
        t //= 2
    return dim


def multi_head_v2(x, wq, wk, wv, w_proj, b_proj, *,
                  q_tile=128, kv_tile=128, proj_seq_tile=256):
    """MultiHeadV2 forward.

    x        : (B, T, C)  float32
    wq/wk/wv : (H, O, C)  per-head PyTorch-style Linear weights (no bias)
    w_proj   : (H*O, H*O) output projection weight (PyTorch layout)
    b_proj   : (H*O,)     output projection bias
    returns  : (B, T, H*O)
    """
    B, T, C = x.shape
    H, O, _ = wq.shape
    HO = H * O
    scale = float(C) ** -0.5   # NOTE: module scales by in_size, not head size.

    # ---- host-side weight packing (pre-transposed: no .T inside kernels) --
    # (3H, O, C) -> (3HO, C) -> (C, 3HO); column group j*O:(j+1)*O is
    # Q head j for j < H, K head j-H for H <= j < 2H, else V head j-2H.
    wqkv_t = (jnp.concatenate([wq, wk, wv], axis=0)
                 .reshape(3 * HO, C).T.astype(jnp.bfloat16))      # (C, 3HO)
    wp_t = w_proj.T.astype(jnp.bfloat16)                           # (HO, HO)
    bp = b_proj.reshape(1, HO).astype(jnp.float32)                 # (1, HO)

    tt = _pick_tile(T, proj_seq_tile)
    tq = _pick_tile(T, q_tile)
    tk = _pick_tile(T, kv_tile)
    assert T % tt == 0 and T % tq == 0 and T % tk == 0

    vmem_limit = 32 * 1024 * 1024

    # ------------------ kernel 1: fused QKV projection ---------------------
    def qkv_proj_kernel(x_ref, w_ref, q_ref, k_ref, v_ref):
        # x_ref: (1, tt, C) f32;  w_ref: (C, 3HO) bf16
        # q/k/v_ref: (1, H, tt, O) bf16  (head-major layout)
        xb = x_ref[0].astype(jnp.bfloat16)                       # (tt, C)
        y = jnp.dot(xb, w_ref[...],
                    preferred_element_type=jnp.float32)          # (tt, 3HO)
        yb = y.astype(jnp.bfloat16)
        for h in range(H):                                       # static unroll
            q_ref[0, h] = yb[:, h * O:(h + 1) * O]
            k_ref[0, h] = yb[:, (H + h) * O:(H + h + 1) * O]
            v_ref[0, h] = yb[:, (2 * H + h) * O:(2 * H + h + 1) * O]

    qkv_shape = jax.ShapeDtypeStruct((B, H, T, O), jnp.bfloat16)
    q, k, v = pl.pallas_call(
        qkv_proj_kernel,
        out_shape=(qkv_shape, qkv_shape, qkv_shape),
        grid_spec=pltpu.PrefetchScalarGridSpec(
            num_scalar_prefetch=0,
            grid=(B, T // tt),
            in_specs=[
                pl.BlockSpec((1, tt, C), lambda b, t: (b, t, 0)),
                pl.BlockSpec((C, 3 * HO), lambda b, t: (0, 0)),
            ],
            out_specs=[
                pl.BlockSpec((1, H, tt, O), lambda b, t: (b, 0, t, 0)),
                pl.BlockSpec((1, H, tt, O), lambda b, t: (b, 0, t, 0)),
                pl.BlockSpec((1, H, tt, O), lambda b, t: (b, 0, t, 0)),
            ],
        ),
        compiler_params=pltpu.CompilerParams(
            dimension_semantics=("parallel", "parallel"),
            vmem_limit_bytes=vmem_limit,
        ),
    )(x, wqkv_t)

    # -------- kernel 2: flash-style causal MHA + fused output proj ---------
    def mha_kernel(q_ref, k_ref, v_ref, wp_ref, bp_ref, o_ref,
                   m_sc, l_sc, acc_sc):
        qi = pl.program_id(1)
        ki = pl.program_id(2)

        @pl.when(ki == 0)
        def _init():
            m_sc[...] = jnp.full((H, tq, 1), -jnp.inf, jnp.float32)
            l_sc[...] = jnp.zeros((H, tq, 1), jnp.float32)
            acc_sc[...] = jnp.zeros((H, tq, O), jnp.float32)

        # Causal: skip kv blocks that lie entirely above the diagonal.
        @pl.when(ki * tk < (qi + 1) * tq)
        def _compute():
            qb = q_ref[0]                                    # (H, tq, O) bf16
            kb = k_ref[0]                                    # (H, tk, O) bf16
            vb = v_ref[0]                                    # (H, tk, O) bf16
            s = jnp.einsum("hqd,hkd->hqk", qb, kb,
                           preferred_element_type=jnp.float32) * scale
            rows = qi * tq + jax.lax.broadcasted_iota(jnp.int32, (tq, tk), 0)
            cols = ki * tk + jax.lax.broadcasted_iota(jnp.int32, (tq, tk), 1)
            s = jnp.where((cols <= rows)[None, :, :], s, -jnp.inf)

            m_prev = m_sc[...]
            m_new = jnp.maximum(m_prev, s.max(axis=-1, keepdims=True))
            alpha = jnp.exp(m_prev - m_new)
            p = jnp.exp(s - m_new)
            l_sc[...] = alpha * l_sc[...] + p.sum(axis=-1, keepdims=True)
            acc_sc[...] = alpha * acc_sc[...] + jnp.einsum(
                "hqk,hkd->hqd", p.astype(jnp.bfloat16), vb,
                preferred_element_type=jnp.float32)
            m_sc[...] = m_new

        @pl.when(ki == pl.num_programs(2) - 1)
        def _finalize():
            inv_l = pl.reciprocal(l_sc[...], approx=True)    # EUP, ~free
            heads = acc_sc[...] * inv_l                      # (H, tq, O) f32
            # Concatenate heads along lanes -> lane-dense (tq, H*O) block.
            concat = jnp.concatenate([heads[h] for h in range(H)], axis=-1)
            y = jnp.dot(concat.astype(jnp.bfloat16), wp_ref[...],
                        preferred_element_type=jnp.float32)  # (tq, HO)
            o_ref[0] = (y + bp_ref[...]).astype(o_ref.dtype)

    out = pl.pallas_call(
        mha_kernel,
        out_shape=jax.ShapeDtypeStruct((B, T, HO), x.dtype),
        grid_spec=pltpu.PrefetchScalarGridSpec(
            num_scalar_prefetch=0,
            grid=(B, T // tq, T // tk),
            in_specs=[
                pl.BlockSpec((1, H, tq, O), lambda b, qi, ki: (b, 0, qi, 0)),
                pl.BlockSpec((1, H, tk, O), lambda b, qi, ki: (b, 0, ki, 0)),
                pl.BlockSpec((1, H, tk, O), lambda b, qi, ki: (b, 0, ki, 0)),
                pl.BlockSpec((HO, HO), lambda b, qi, ki: (0, 0)),
                pl.BlockSpec((1, HO), lambda b, qi, ki: (0, 0)),
            ],
            out_specs=pl.BlockSpec((1, tq, HO), lambda b, qi, ki: (b, qi, 0)),
            scratch_shapes=[
                pltpu.VMEM((H, tq, 1), jnp.float32),   # running row max m
                pltpu.VMEM((H, tq, 1), jnp.float32),   # running denominator l
                pltpu.VMEM((H, tq, O), jnp.float32),   # running numerator
            ],
        ),
        compiler_params=pltpu.CompilerParams(
            dimension_semantics=("parallel", "parallel", "arbitrary"),
            vmem_limit_bytes=vmem_limit,
        ),
    )(q, k, v, wp_t, bp)
    return out


def reference_multi_head_v2(x, wq, wk, wv, w_proj, b_proj):
    """Pure-JAX f32 reference mirroring the PyTorch MultiHeadV2 forward."""
    B, T, C = x.shape
    H, O, _ = wq.shape
    k = jnp.einsum("btc,hoc->bhto", x, wk)
    q = jnp.einsum("btc,hoc->bhto", x, wq)
    v = jnp.einsum("btc,hoc->bhto", x, wv)
    w = jnp.einsum("bhto,bhso->bhts", q, k) * (float(C) ** -0.5)
    tril = jnp.tril(jnp.ones((T, T), dtype=bool))
    w = jnp.where(tril, w, -jnp.inf)
    w = jax.nn.softmax(w, axis=-1)
    heads = jnp.einsum("bhts,bhso->bhto", w, v)          # (B, H, T, O)
    concat = heads.transpose(0, 2, 1, 3).reshape(B, T, H * O)
    return concat @ w_proj.T + b_proj


if __name__ == "__main__":
    # Small shapes consistent with the module: block_size == T.
    B, T = 2, 8
    in_size, head_size, num_heads = 32, 16, 8
    HO = head_size * num_heads          # 128 -> lane-dense concat/proj/output

    key = jax.random.PRNGKey(0)
    kx, kwq, kwk, kwv, kwp, kbp = jax.random.split(key, 6)

    x = jax.random.normal(kx, (B, T, in_size), dtype=jnp.float32)

    # Deterministic PyTorch-Linear-style uniform init.
    bound = 1.0 / (in_size ** 0.5)
    wq = jax.random.uniform(kwq, (num_heads, head_size, in_size),
                            jnp.float32, -bound, bound)
    wk = jax.random.uniform(kwk, (num_heads, head_size, in_size),
                            jnp.float32, -bound, bound)
    wv = jax.random.uniform(kwv, (num_heads, head_size, in_size),
                            jnp.float32, -bound, bound)
    pbound = 1.0 / (HO ** 0.5)
    w_proj = jax.random.uniform(kwp, (HO, HO), jnp.float32, -pbound, pbound)
    b_proj = jax.random.uniform(kbp, (HO,), jnp.float32, -pbound, pbound)

    out = multi_head_v2(x, wq, wk, wv, w_proj, b_proj)
    out = jax.block_until_ready(out)

    ref = reference_multi_head_v2(x, wq, wk, wv, w_proj, b_proj)
    assert out.shape == (B, T, HO)
    max_err = jnp.max(jnp.abs(out - ref))
    assert jnp.allclose(out, ref, atol=3e-2, rtol=3e-2), (
        f"mismatch vs reference, max abs err = {max_err}")

    print("KERNEL_OK")
</pallas_src>

<mosaic_0001>
module attributes {stable_mosaic.version = 11 : i64} {
  func.func @qkv_proj_kernel(%arg0: i32, %arg1: i32, %arg2: memref<1x8x32xf32, #tpu.memory_space<vmem>>, %arg3: memref<32x384xbf16, #tpu.memory_space<vmem>>, %arg4: memref<1x8x8x16xbf16, #tpu.memory_space<vmem>>, %arg5: memref<1x8x8x16xbf16, #tpu.memory_space<vmem>>, %arg6: memref<1x8x8x16xbf16, #tpu.memory_space<vmem>>) attributes {dimension_semantics = [#tpu.dimension_semantics<parallel>, #tpu.dimension_semantics<parallel>], iteration_bounds = array<i64: 2, 1>, scalar_prefetch = 0 : i64, scratch_operands = 0 : i64, tpu.core_type = #tpu.core_type<tc>, window_params = [{transform_indices = @transform_0, window_bounds = array<i64: 1, 8, 32>}, {pipeline_mode = #tpu.pipeline_mode<synchronous>, transform_indices = @transform_1, window_bounds = array<i64: 32, 384>}, {transform_indices = @transform_2, window_bounds = array<i64: 1, 8, 8, 16>}, {transform_indices = @transform_3, window_bounds = array<i64: 1, 8, 8, 16>}, {transform_indices = @transform_4, window_bounds = array<i64: 1, 8, 8, 16>}]} {
    %c0 = arith.constant 0 : index
    %c0_0 = arith.constant 0 : index
    %c0_1 = arith.constant 0 : index
    %0 = vector.load %arg2[%c0, %c0_0, %c0_1] : memref<1x8x32xf32, #tpu.memory_space<vmem>>, vector<1x8x32xf32>
    %1 = vector.shape_cast %0 : vector<1x8x32xf32> to vector<8x32xf32>
    %2 = arith.truncf %1 : vector<8x32xf32> to vector<8x32xbf16>
    %c0_2 = arith.constant 0 : index
    %c0_3 = arith.constant 0 : index
    %3 = vector.load %arg3[%c0_2, %c0_3] : memref<32x384xbf16, #tpu.memory_space<vmem>>, vector<32x384xbf16>
    %cst = arith.constant dense<0.000000e+00> : vector<8x384xf32>
    %4 = tpu.matmul %2, %3, %cst {dimension_numbers = #tpu.dot_dimension_numbers<[1], [0], [0], [1], [0, 0, 1, 1], [], []>} : vector<8x32xbf16>, vector<32x384xbf16>, vector<8x384xf32> -> vector<8x384xf32>
    %5 = arith.truncf %4 : vector<8x384xf32> to vector<8x384xbf16>
    %6 = vector.extract_strided_slice %5 {offsets = [0, 0], sizes = [8, 16], strides = [1, 1]} : vector<8x384xbf16> to vector<8x16xbf16>
    %c0_4 = arith.constant 0 : index
    %c0_5 = arith.constant 0 : index
    %c0_6 = arith.constant 0 : index
    %c0_7 = arith.constant 0 : index
    %7 = vector.load %arg4[%c0_4, %c0_5, %c0_6, %c0_7] : memref<1x8x8x16xbf16, #tpu.memory_space<vmem>>, vector<1x1x8x16xbf16>
    %8 = vector.shape_cast %7 : vector<1x1x8x16xbf16> to vector<8x16xbf16>
    %9 = vector.shape_cast %6 : vector<8x16xbf16> to vector<1x1x8x16xbf16>
    tpu.vector_store %arg4[%c0_4, %c0_5, %c0_6, %c0_7], %9 {strides = array<i32>} : memref<1x8x8x16xbf16, #tpu.memory_space<vmem>>, vector<1x1x8x16xbf16>,
    %10 = vector.extract_strided_slice %5 {offsets = [0, 128], sizes = [8, 16], strides = [1, 1]} : vector<8x384xbf16> to vector<8x16xbf16>
    %c0_8 = arith.constant 0 : index
    %c0_9 = arith.constant 0 : index
    %c0_10 = arith.constant 0 : index
    %c0_11 = arith.constant 0 : index
    %11 = vector.load %arg5[%c0_8, %c0_9, %c0_10, %c0_11] : memref<1x8x8x16xbf16, #tpu.memory_space<vmem>>, vector<1x1x8x16xbf16>
    %12 = vector.shape_cast %11 : vector<1x1x8x16xbf16> to vector<8x16xbf16>
    %13 = vector.shape_cast %10 : vector<8x16xbf16> to vector<1x1x8x16xbf16>
    tpu.vector_store %arg5[%c0_8, %c0_9, %c0_10, %c0_11], %13 {strides = array<i32>} : memref<1x8x8x16xbf16, #tpu.memory_space<vmem>>, vector<1x1x8x16xbf16>,
    %14 = vector.extract_strided_slice %5 {offsets = [0, 256], sizes = [8, 16], strides = [1, 1]} : vector<8x384xbf16> to vector<8x16xbf16>
    %c0_12 = arith.constant 0 : index
    %c0_13 = arith.constant 0 : index
    %c0_14 = arith.constant 0 : index
    %c0_15 = arith.constant 0 : index
    %15 = vector.load %arg6[%c0_12, %c0_13, %c0_14, %c0_15] : memref<1x8x8x16xbf16, #tpu.memory_space<vmem>>, vector<1x1x8x16xbf16>
    %16 = vector.shape_cast %15 : vector<1x1x8x16xbf16> to vector<8x16xbf16>
    %17 = vector.shape_cast %14 : vector<8x16xbf16> to vector<1x1x8x16xbf16>
    tpu.vector_store %arg6[%c0_12, %c0_13, %c0_14, %c0_15], %17 {strides = array<i32>} : memref<1x8x8x16xbf16, #tpu.memory_space<vmem>>, vector<1x1x8x16xbf16>,
    %18 = vector.extract_strided_slice %5 {offsets = [0, 16], sizes = [8, 16], strides = [1, 1]} : vector<8x384xbf16> to vector<8x16xbf16>
    %c0_16 = arith.constant 0 : index
    %c1 = arith.constant 1 : index
    %c0_17 = arith.constant 0 : index
    %c0_18 = arith.constant 0 : index
    %19 = vector.load %arg4[%c0_16, %c1, %c0_17, %c0_18] : memref<1x8x8x16xbf16, #tpu.memory_space<vmem>>, vector<1x1x8x16xbf16>
    %20 = vector.shape_cast %19 : vector<1x1x8x16xbf16> to vector<8x16xbf16>
    %21 = vector.shape_cast %18 : vector<8x16xbf16> to vector<1x1x8x16xbf16>
    tpu.vector_store %arg4[%c0_16, %c1, %c0_17, %c0_18], %21 {strides = array<i32>} : memref<1x8x8x16xbf16, #tpu.memory_space<vmem>>, vector<1x1x8x16xbf16>,
    %22 = vector.extract_strided_slice %5 {offsets = [0, 144], sizes = [8, 16], strides = [1, 1]} : vector<8x384xbf16> to vector<8x16xbf16>
    %c0_19 = arith.constant 0 : index
    %c1_20 = arith.constant 1 : index
    %c0_21 = arith.constant 0 : index
    %c0_22 = arith.constant 0 : index
    %23 = vector.load %arg5[%c0_19, %c1_20, %c0_21, %c0_22] : memref<1x8x8x16xbf16, #tpu.memory_space<vmem>>, vector<1x1x8x16xbf16>
    %24 = vector.shape_cast %23 : vector<1x1x8x16xbf16> to vector<8x16xbf16>
    %25 = vector.shape_cast %22 : vector<8x16xbf16> to vector<1x1x8x16xbf16>
    tpu.vector_store %arg5[%c0_19, %c1_20, %c0_21, %c0_22], %25 {strides = array<i32>} : memref<1x8x8x16xbf16, #tpu.memory_space<vmem>>, vector<1x1x8x16xbf16>,
    %26 = vector.extract_strided_slice %5 {offsets = [0, 272], sizes = [8, 16], strides = [1, 1]} : vector<8x384xbf16> to vector<8x16xbf16>
    %c0_23 = arith.constant 0 : index
    %c1_24 = arith.constant 1 : index
    %c0_25 = arith.constant 0 : index
    %c0_26 = arith.constant 0 : index
    %27 = vector.load %arg6[%c0_23, %c1_24, %c0_25, %c0_26] : memref<1x8x8x16xbf16, #tpu.memory_space<vmem>>, vector<1x1x8x16xbf16>
    %28 = vector.shape_cast %27 : vector<1x1x8x16xbf16> to vector<8x16xbf16>
    %29 = vector.shape_cast %26 : vector<8x16xbf16> to vector<1x1x8x16xbf16>
    tpu.vector_store %arg6[%c0_23, %c1_24, %c0_25, %c0_26], %29 {strides = array<i32>} : memref<1x8x8x16xbf16, #tpu.memory_space<vmem>>, vector<1x1x8x16xbf16>,
    %30 = vector.extract_strided_slice %5 {offsets = [0, 32], sizes = [8, 16], strides = [1, 1]} : vector<8x384xbf16> to vector<8x16xbf16>
    %c0_27 = arith.constant 0 : index
    %c2 = arith.constant 2 : index
    %c0_28 = arith.constant 0 : index
    %c0_29 = arith.constant 0 : index
    %31 = vector.load %arg4[%c0_27, %c2, %c0_28, %c0_29] : memref<1x8x8x16xbf16, #tpu.memory_space<vmem>>, vector<1x1x8x16xbf16>
    %32 = vector.shape_cast %31 : vector<1x1x8x16xbf16> to vector<8x16xbf16>
    %33 = vector.shape_cast %30 : vector<8x16xbf16> to vector<1x1x8x16xbf16>
    tpu.vector_store %arg4[%c0_27, %c2, %c0_28, %c0_29], %33 {strides = array<i32>} : memref<1x8x8x16xbf16, #tpu.memory_space<vmem>>, vector<1x1x8x16xbf16>,
    %34 = vector.extract_strided_slice %5 {offsets = [0, 160], sizes = [8, 16], strides = [1, 1]} : vector<8x384xbf16> to vector<8x16xbf16>
    %c0_30 = arith.constant 0 : index
    %c2_31 = arith.constant 2 : index
    %c0_32 = arith.constant 0 : index
    %c0_33 = arith.constant 0 : index
    %35 = vector.load %arg5[%c0_30, %c2_31, %c0_32, %c0_33] : memref<1x8x8x16xbf16, #tpu.memory_space<vmem>>, vector<1x1x8x16xbf16>
    %36 = vector.shape_cast %35 : vector<1x1x8x16xbf16> to vector<8x16xbf16>
    %37 = vector.shape_cast %34 : vector<8x16xbf16> to vector<1x1x8x16xbf16>
    tpu.vector_store %arg5[%c0_30, %c2_31, %c0_32, %c0_33], %37 {strides = array<i32>} : memref<1x8x8x16xbf16, #tpu.memory_space<vmem>>, vector<1x1x8x16xbf16>,
    %38 = vector.extract_strided_slice %5 {offsets = [0, 288], sizes = [8, 16], strides = [1, 1]} : vector<8x384xbf16> to vector<8x16xbf16>
    %c0_34 = arith.constant 0 : index
    %c2_35 = arith.constant 2 : index
    %c0_36 = arith.constant 0 : index
    %c0_37 = arith.constant 0 : index
    %39 = vector.load %arg6[%c0_34, %c2_35, %c0_36, %c0_37] : memref<1x8x8x16xbf16, #tpu.memory_space<vmem>>, vector<1x1x8x16xbf16>
    %40 = vector.shape_cast %39 : vector<1x1x8x16xbf16> to vector<8x16xbf16>
    %41 = vector.shape_cast %38 : vector<8x16xbf16> to vector<1x1x8x16xbf16>
    tpu.vector_store %arg6[%c0_34, %c2_35, %c0_36, %c0_37], %41 {strides = array<i32>} : memref<1x8x8x16xbf16, #tpu.memory_space<vmem>>, vector<1x1x8x16xbf16>,
    %42 = vector.extract_strided_slice %5 {offsets = [0, 48], sizes = [8, 16], strides = [1, 1]} : vector<8x384xbf16> to vector<8x16xbf16>
    %c0_38 = arith.constant 0 : index
    %c3 = arith.constant 3 : index
    %c0_39 = arith.constant 0 : index
    %c0_40 = arith.constant 0 : index
    %43 = vector.load %arg4[%c0_38, %c3, %c0_39, %c0_40] : memref<1x8x8x16xbf16, #tpu.memory_space<vmem>>, vector<1x1x8x16xbf16>
    %44 = vector.shape_cast %43 : vector<1x1x8x16xbf16> to vector<8x16xbf16>
    %45 = vector.shape_cast %42 : vector<8x16xbf16> to vector<1x1x8x16xbf16>
    tpu.vector_store %arg4[%c0_38, %c3, %c0_39, %c0_40], %45 {strides = array<i32>} : memref<1x8x8x16xbf16, #tpu.memory_space<vmem>>, vector<1x1x8x16xbf16>,
    %46 = vector.extract_strided_slice %5 {offsets = [0, 176], sizes = [8, 16], strides = [1, 1]} : vector<8x384xbf16> to vector<8x16xbf16>
    %c0_41 = arith.constant 0 : index
    %c3_42 = arith.constant 3 : index
    %c0_43 = arith.constant 0 : index
    %c0_44 = arith.constant 0 : index
    %47 = vector.load %arg5[%c0_41, %c3_42, %c0_43, %c0_44] : memref<1x8x8x16xbf16, #tpu.memory_space<vmem>>, vector<1x1x8x16xbf16>
    %48 = vector.shape_cast %47 : vector<1x1x8x16xbf16> to vector<8x16xbf16>
    %49 = vector.shape_cast %46 : vector<8x16xbf16> to vector<1x1x8x16xbf16>
    tpu.vector_store %arg5[%c0_41, %c3_42, %c0_43, %c0_44], %49 {strides = array<i32>} : memref<1x8x8x16xbf16, #tpu.memory_space<vmem>>, vector<1x1x8x16xbf16>,
    %50 = vector.extract_strided_slice %5 {offsets = [0, 304], sizes = [8, 16], strides = [1, 1]} : vector<8x384xbf16> to vector<8x16xbf16>
    %c0_45 = arith.constant 0 : index
    %c3_46 = arith.constant 3 : index
    %c0_47 = arith.constant 0 : index
    %c0_48 = arith.constant 0 : index
    %51 = vector.load %arg6[%c0_45, %c3_46, %c0_47, %c0_48] : memref<1x8x8x16xbf16, #tpu.memory_space<vmem>>, vector<1x1x8x16xbf16>
    %52 = vector.shape_cast %51 : vector<1x1x8x16xbf16> to vector<8x16xbf16>
    %53 = vector.shape_cast %50 : vector<8x16xbf16> to vector<1x1x8x16xbf16>
    tpu.vector_store %arg6[%c0_45, %c3_46, %c0_47, %c0_48], %53 {strides = array<i32>} : memref<1x8x8x16xbf16, #tpu.memory_space<vmem>>, vector<1x1x8x16xbf16>,
    %54 = vector.extract_strided_slice %5 {offsets = [0, 64], sizes = [8, 16], strides = [1, 1]} : vector<8x384xbf16> to vector<8x16xbf16>
    %c0_49 = arith.constant 0 : index
    %c4 = arith.constant 4 : index
    %c0_50 = arith.constant 0 : index
    %c0_51 = arith.constant 0 : index
    %55 = vector.load %arg4[%c0_49, %c4, %c0_50, %c0_51] : memref<1x8x8x16xbf16, #tpu.memory_space<vmem>>, vector<1x1x8x16xbf16>
    %56 = vector.shape_cast %55 : vector<1x1x8x16xbf16> to vector<8x16xbf16>
    %57 = vector.shape_cast %54 : vector<8x16xbf16> to vector<1x1x8x16xbf16>
    tpu.vector_store %arg4[%c0_49, %c4, %c0_50, %c0_51], %57 {strides = array<i32>} : memref<1x8x8x16xbf16, #tpu.memory_space<vmem>>, vector<1x1x8x16xbf16>,
    %58 = vector.extract_strided_slice %5 {offsets = [0, 192], sizes = [8, 16], strides = [1, 1]} : vector<8x384xbf16> to vector<8x16xbf16>
    %c0_52 = arith.constant 0 : index
    %c4_53 = arith.constant 4 : index
    %c0_54 = arith.constant 0 : index
    %c0_55 = arith.constant 0 : index
    %59 = vector.load %arg5[%c0_52, %c4_53, %c0_54, %c0_55] : memref<1x8x8x16xbf16, #tpu.memory_space<vmem>>, vector<1x1x8x16xbf16>
    %60 = vector.shape_cast %59 : vector<1x1x8x16xbf16> to vector<8x16xbf16>
    %61 = vector.shape_cast %58 : vector<8x16xbf16> to vector<1x1x8x16xbf16>
    tpu.vector_store %arg5[%c0_52, %c4_53, %c0_54, %c0_55], %61 {strides = array<i32>} : memref<1x8x8x16xbf16, #tpu.memory_space<vmem>>, vector<1x1x8x16xbf16>,
    %62 = vector.extract_strided_slice %5 {offsets = [0, 320], sizes = [8, 16], strides = [1, 1]} : vector<8x384xbf16> to vector<8x16xbf16>
    %c0_56 = arith.constant 0 : index
    %c4_57 = arith.constant 4 : index
    %c0_58 = arith.constant 0 : index
    %c0_59 = arith.constant 0 : index
    %63 = vector.load %arg6[%c0_56, %c4_57, %c0_58, %c0_59] : memref<1x8x8x16xbf16, #tpu.memory_space<vmem>>, vector<1x1x8x16xbf16>
    %64 = vector.shape_cast %63 : vector<1x1x8x16xbf16> to vector<8x16xbf16>
    %65 = vector.shape_cast %62 : vector<8x16xbf16> to vector<1x1x8x16xbf16>
    tpu.vector_store %arg6[%c0_56, %c4_57, %c0_58, %c0_59], %65 {strides = array<i32>} : memref<1x8x8x16xbf16, #tpu.memory_space<vmem>>, vector<1x1x8x16xbf16>,
    %66 = vector.extract_strided_slice %5 {offsets = [0, 80], sizes = [8, 16], strides = [1, 1]} : vector<8x384xbf16> to vector<8x16xbf16>
    %c0_60 = arith.constant 0 : index
    %c5 = arith.constant 5 : index
    %c0_61 = arith.constant 0 : index
    %c0_62 = arith.constant 0 : index
    %67 = vector.load %arg4[%c0_60, %c5, %c0_61, %c0_62] : memref<1x8x8x16xbf16, #tpu.memory_space<vmem>>, vector<1x1x8x16xbf16>
    %68 = vector.shape_cast %67 : vector<1x1x8x16xbf16> to vector<8x16xbf16>
    %69 = vector.shape_cast %66 : vector<8x16xbf16> to vector<1x1x8x16xbf16>
    tpu.vector_store %arg4[%c0_60, %c5, %c0_61, %c0_62], %69 {strides = array<i32>} : memref<1x8x8x16xbf16, #tpu.memory_space<vmem>>, vector<1x1x8x16xbf16>,
    %70 = vector.extract_strided_slice %5 {offsets = [0, 208], sizes = [8, 16], strides = [1, 1]} : vector<8x384xbf16> to vector<8x16xbf16>
    %c0_63 = arith.constant 0 : index
    %c5_64 = arith.constant 5 : index
    %c0_65 = arith.constant 0 : index
    %c0_66 = arith.constant 0 : index
    %71 = vector.load %arg5[%c0_63, %c5_64, %c0_65, %c0_66] : memref<1x8x8x16xbf16, #tpu.memory_space<vmem>>, vector<1x1x8x16xbf16>
    %72 = vector.shape_cast %71 : vector<1x1x8x16xbf16> to vector<8x16xbf16>
    %73 = vector.shape_cast %70 : vector<8x16xbf16> to vector<1x1x8x16xbf16>
    tpu.vector_store %arg5[%c0_63, %c5_64, %c0_65, %c0_66], %73 {strides = array<i32>} : memref<1x8x8x16xbf16, #tpu.memory_space<vmem>>, vector<1x1x8x16xbf16>,
    %74 = vector.extract_strided_slice %5 {offsets = [0, 336], sizes = [8, 16], strides = [1, 1]} : vector<8x384xbf16> to vector<8x16xbf16>
    %c0_67 = arith.constant 0 : index
    %c5_68 = arith.constant 5 : index
    %c0_69 = arith.constant 0 : index
    %c0_70 = arith.constant 0 : index
    %75 = vector.load %arg6[%c0_67, %c5_68, %c0_69, %c0_70] : memref<1x8x8x16xbf16, #tpu.memory_space<vmem>>, vector<1x1x8x16xbf16>
    %76 = vector.shape_cast %75 : vector<1x1x8x16xbf16> to vector<8x16xbf16>
    %77 = vector.shape_cast %74 : vector<8x16xbf16> to vector<1x1x8x16xbf16>
    tpu.vector_store %arg6[%c0_67, %c5_68, %c0_69, %c0_70], %77 {strides = array<i32>} : memref<1x8x8x16xbf16, #tpu.memory_space<vmem>>, vector<1x1x8x16xbf16>,
    %78 = vector.extract_strided_slice %5 {offsets = [0, 96], sizes = [8, 16], strides = [1, 1]} : vector<8x384xbf16> to vector<8x16xbf16>
    %c0_71 = arith.constant 0 : index
    %c6 = arith.constant 6 : index
    %c0_72 = arith.constant 0 : index
    %c0_73 = arith.constant 0 : index
    %79 = vector.load %arg4[%c0_71, %c6, %c0_72, %c0_73] : memref<1x8x8x16xbf16, #tpu.memory_space<vmem>>, vector<1x1x8x16xbf16>
    %80 = vector.shape_cast %79 : vector<1x1x8x16xbf16> to vector<8x16xbf16>
    %81 = vector.shape_cast %78 : vector<8x16xbf16> to vector<1x1x8x16xbf16>
    tpu.vector_store %arg4[%c0_71, %c6, %c0_72, %c0_73], %81 {strides = array<i32>} : memref<1x8x8x16xbf16, #tpu.memory_space<vmem>>, vector<1x1x8x16xbf16>,
    %82 = vector.extract_strided_slice %5 {offsets = [0, 224], sizes = [8, 16], strides = [1, 1]} : vector<8x384xbf16> to vector<8x16xbf16>
    %c0_74 = arith.constant 0 : index
    %c6_75 = arith.constant 6 : index
    %c0_76 = arith.constant 0 : index
    %c0_77 = arith.constant 0 : index
    %83 = vector.load %arg5[%c0_74, %c6_75, %c0_76, %c0_77] : memref<1x8x8x16xbf16, #tpu.memory_space<vmem>>, vector<1x1x8x16xbf16>
    %84 = vector.shape_cast %83 : vector<1x1x8x16xbf16> to vector<8x16xbf16>
    %85 = vector.shape_cast %82 : vector<8x16xbf16> to vector<1x1x8x16xbf16>
    tpu.vector_store %arg5[%c0_74, %c6_75, %c0_76, %c0_77], %85 {strides = array<i32>} : memref<1x8x8x16xbf16, #tpu.memory_space<vmem>>, vector<1x1x8x16xbf16>,
    %86 = vector.extract_strided_slice %5 {offsets = [0, 352], sizes = [8, 16], strides = [1, 1]} : vector<8x384xbf16> to vector<8x16xbf16>
    %c0_78 = arith.constant 0 : index
    %c6_79 = arith.constant 6 : index
    %c0_80 = arith.constant 0 : index
    %c0_81 = arith.constant 0 : index
    %87 = vector.load %arg6[%c0_78, %c6_79, %c0_80, %c0_81] : memref<1x8x8x16xbf16, #tpu.memory_space<vmem>>, vector<1x1x8x16xbf16>
    %88 = vector.shape_cast %87 : vector<1x1x8x16xbf16> to vector<8x16xbf16>
    %89 = vector.shape_cast %86 : vector<8x16xbf16> to vector<1x1x8x16xbf16>
    tpu.vector_store %arg6[%c0_78, %c6_79, %c0_80, %c0_81], %89 {strides = array<i32>} : memref<1x8x8x16xbf16, #tpu.memory_space<vmem>>, vector<1x1x8x16xbf16>,
    %90 = vector.extract_strided_slice %5 {offsets = [0, 112], sizes = [8, 16], strides = [1, 1]} : vector<8x384xbf16> to vector<8x16xbf16>
    %c0_82 = arith.constant 0 : index
    %c7 = arith.constant 7 : index
    %c0_83 = arith.constant 0 : index
    %c0_84 = arith.constant 0 : index
    %91 = vector.load %arg4[%c0_82, %c7, %c0_83, %c0_84] : memref<1x8x8x16xbf16, #tpu.memory_space<vmem>>, vector<1x1x8x16xbf16>
    %92 = vector.shape_cast %91 : vector<1x1x8x16xbf16> to vector<8x16xbf16>
    %93 = vector.shape_cast %90 : vector<8x16xbf16> to vector<1x1x8x16xbf16>
    tpu.vector_store %arg4[%c0_82, %c7, %c0_83, %c0_84], %93 {strides = array<i32>} : memref<1x8x8x16xbf16, #tpu.memory_space<vmem>>, vector<1x1x8x16xbf16>,
    %94 = vector.extract_strided_slice %5 {offsets = [0, 240], sizes = [8, 16], strides = [1, 1]} : vector<8x384xbf16> to vector<8x16xbf16>
    %c0_85 = arith.constant 0 : index
    %c7_86 = arith.constant 7 : index
    %c0_87 = arith.constant 0 : index
    %c0_88 = arith.constant 0 : index
    %95 = vector.load %arg5[%c0_85, %c7_86, %c0_87, %c0_88] : memref<1x8x8x16xbf16, #tpu.memory_space<vmem>>, vector<1x1x8x16xbf16>
    %96 = vector.shape_cast %95 : vector<1x1x8x16xbf16> to vector<8x16xbf16>
    %97 = vector.shape_cast %94 : vector<8x16xbf16> to vector<1x1x8x16xbf16>
    tpu.vector_store %arg5[%c0_85, %c7_86, %c0_87, %c0_88], %97 {strides = array<i32>} : memref<1x8x8x16xbf16, #tpu.memory_space<vmem>>, vector<1x1x8x16xbf16>,
    %98 = vector.extract_strided_slice %5 {offsets = [0, 368], sizes = [8, 16], strides = [1, 1]} : vector<8x384xbf16> to vector<8x16xbf16>
    %c0_89 = arith.constant 0 : index
    %c7_90 = arith.constant 7 : index
    %c0_91 = arith.constant 0 : index
    %c0_92 = arith.constant 0 : index
    %99 = vector.load %arg6[%c0_89, %c7_90, %c0_91, %c0_92] : memref<1x8x8x16xbf16, #tpu.memory_space<vmem>>, vector<1x1x8x16xbf16>
    %100 = vector.shape_cast %99 : vector<1x1x8x16xbf16> to vector<8x16xbf16>
    %101 = vector.shape_cast %98 : vector<8x16xbf16> to vector<1x1x8x16xbf16>
    tpu.vector_store %arg6[%c0_89, %c7_90, %c0_91, %c0_92], %101 {strides = array<i32>} : memref<1x8x8x16xbf16, #tpu.memory_space<vmem>>, vector<1x1x8x16xbf16>,
    return
  }
  func.func @transform_0(%arg0: i32, %arg1: i32) -> (i32, i32, i32) {
    %c0_i32 = arith.constant 0 : i32
    %c0_i32_0 = arith.constant 0 : i32
    return %arg0, %arg1, %c0_i32 : i32, i32, i32
  }
  func.func @transform_1(%arg0: i32, %arg1: i32) -> (i32, i32) {
    %c0_i32 = arith.constant 0 : i32
    %c0_i32_0 = arith.constant 0 : i32
    %c0_i32_1 = arith.constant 0 : i32
    return %c0_i32, %c0_i32_0 : i32, i32
  }
  func.func @transform_2(%arg0: i32, %arg1: i32) -> (i32, i32, i32, i32) {
    %c0_i32 = arith.constant 0 : i32
    %c0_i32_0 = arith.constant 0 : i32
    %c0_i32_1 = arith.constant 0 : i32
    return %arg0, %c0_i32, %arg1, %c0_i32_0 : i32, i32, i32, i32
  }
  func.func @transform_3(%arg0: i32, %arg1: i32) -> (i32, i32, i32, i32) {
    %c0_i32 = arith.constant 0 : i32
    %c0_i32_0 = arith.constant 0 : i32
    %c0_i32_1 = arith.constant 0 : i32
    return %arg0, %c0_i32, %arg1, %c0_i32_0 : i32, i32, i32, i32
  }
  func.func @transform_4(%arg0: i32, %arg1: i32) -> (i32, i32, i32, i32) {
    %c0_i32 = arith.constant 0 : i32
    %c0_i32_0 = arith.constant 0 : i32
    %c0_i32_1 = arith.constant 0 : i32
    return %arg0, %c0_i32, %arg1, %c0_i32_0 : i32, i32, i32, i32
  }
}

</mosaic_0001>

<llo_original>
// kernel: tpu_custom_call.1
$region0: #{tpu_custom_call.1}
  #allocation0 [shape = 'u32[]', space=smem, size = 0x4, offset = 0x4, fixed_abs, tag = 'smem constant byte address 0x4 - core index']
  #allocation1 [shape = 'u32[144,128]{1,0:T(1,128)}', space=vmem, size = 0x12000, scoped, tag = 'internal scratch']
  %s0 = inlined_call_operand.hbm [shape: f32[2,8,32], index: 0, kind: input, shape index: {}]
  %s1 = inlined_call_operand.hbm [shape: bf16[32,384], index: 1, kind: input, shape index: {}]
  %s2 = inlined_call_operand.hbm [shape: bf16[2,8,8,16], index: 2, kind: output, shape index: {0}]
  %s3 = inlined_call_operand.hbm [shape: bf16[2,8,8,16], index: 3, kind: output, shape index: {1}]
  %s4 = inlined_call_operand.hbm [shape: bf16[2,8,8,16], index: 4, kind: output, shape index: {2}]
  %5 = xla_tuple %s2, %s3, %s4
  %s6 = sld [smem:[#allocation0]]
  $region65: #{tpu_custom_call.1} parent=0
    _
  %s8 = ssub.s32 1, %s6
  %s9 = scalar_select 0, %s8, %s6
  $region1: #{tpu_custom_call.1} parent=0
    #allocation2 [shape = 'u8[8192]{0}', space=vmem, size = 0x2000, scoped, tag = 'input window, operand 0']
    #allocation3 [shape = 's32[2]{0}', space=sflag, size = 0x8, scoped, tag = 'scoped memory for tpu_custom_call.1']
    #allocation4 [shape = 's32[2]{0}', space=sflag, size = 0x8, scoped, tag = 'scoped memory for tpu_custom_call.1']
    #allocation5 [shape = 'u8[24576]{0}', space=vmem, size = 0x6000, scoped, tag = 'input window, operand 1, single buffered']
    #allocation6 [shape = 's32[1]{0}', space=sflag, size = 0x4, scoped, tag = 'scoped memory for tpu_custom_call.1']
    #allocation7 [shape = 'u8[32768]{0}', space=vmem, size = 0x8000, scoped, tag = 'output window, operand 0']
    #allocation8 [shape = 'u8[32768]{0}', space=vmem, size = 0x8000, scoped, tag = 'output window, operand 1']
    #allocation9 [shape = 's32[2]{0}', space=sflag, size = 0x8, scoped, tag = 'scoped memory for tpu_custom_call.1']
    #allocation10 [shape = 'u8[32768]{0}', space=vmem, size = 0x8000, scoped, tag = 'output window, operand 2']
    %10 = vsyncpa [#allocation3], 0
    %s11 = scalar_lea.sflag [#allocation3], 1
    %12 = vsyncpa %s11, 0
    %13 = vsyncpa [#allocation6], 0
    %14 = vsyncpa [#allocation4], 0
    %s15 = scalar_lea.sflag [#allocation4], 1
    %16 = vsyncpa %s15, 0
    %17 = vsyncpa [#allocation9], 0
    %s18 = scalar_lea.sflag [#allocation9], 1
    %19 = vsyncpa %s18, 0
    loop: start=0, step=1, limit=4
    $region2: #{tpu_custom_call.1} parent=1 // loop_pre_header
      _
    $region3: #{tpu_custom_call.1} parent=1 // loop_header
      %s21 = sphi 0, %s25
      %p22 = scmp.ge.s32.totalorder %s21, 4
      %s28 = sphi 0, %s40
      %s29 = sphi 0, %s36
      %s30 = sphi 0, %s28
      %s31 = sphi 0, %s29
      %s32 = sphi 0, %s30
      %s33 = sphi 0, %s31
      %s45 = sphi 0, %s47
      %s48 = sphi 0, %s45
      %s49 = sphi 0, %s48
      %s65 = sphi 0, %s49
      %s69 = sphi 0, %s69
      %s71 = sphi 0, %s69
      %s72 = sphi 0, %s71
      %s86 = sphi 0, %s72
      %s94 = sphi 0, %s96
      %s97 = sphi 0, %s94
      %s98 = sphi 0, %s97
      %s114 = sphi 0, %s98
      %s122 = sphi 0, %s124
      %s125 = sphi 0, %s122
      %s126 = sphi 0, %s125
      %s142 = sphi 0, %s126
      %s150 = sphi 0, %s152
      %s153 = sphi 0, %s150
      %s154 = sphi 0, %s153
      %s170 = sphi 0, %s154
    $region4: #{tpu_custom_call.1} parent=1 // loop_header_branch
      %24 = sbr.rel (%p22) target = $region8
    $region5: #{tpu_custom_call.1} parent=1 // loop_body
      %s26 = ssub.s32 %s21, 1
      %s27 = ssub.s32 %s21, 2
      %s34 = sadd.s32 1, %s29
      %p35 = scmp.ge.s32.totalorder %s34, 1
      %s36 = scalar_select %p35, 0, %s34
      %s37 = sadd.s32 1, %s28
      %s38 = scalar_select %p35, %s37, %s28
      %p39 = scmp.ge.s32.totalorder %s38, 2
      %s40 = scalar_select %p39, 0, %s38
      %s41 = ssub.s32 %s28, %s40
      %s42 = ssub.s32 %s29, %s36
      %s43 = sor.u32 %s41, %s42
      %p44 = scmp.eq.s32.totalorder %s43, 0
      %s46 = sadd.s32 %s45, 1
      %s47 = scalar_select %p44, %s45, %s46
      %p50 = pneg %p44
      %p51 = scmp.eq.s32.totalorder %s21, 1
      %p52 = por %p50, %p51
      %p53 = scmp.ne.s32.totalorder %s45, %s48
      %p54 = scmp.eq.s32.totalorder %s21, 0
      %p55 = por %p53, %p54
      %p56 = scmp.ne.s32.totalorder %s45, %s48
      %p57 = scmp.eq.s32.totalorder %s26, 1
      %p58 = por %p56, %p57
      %p59 = scmp.ne.s32.totalorder %s48, %s49
      %p60 = scmp.eq.s32.totalorder %s26, 0
      %p61 = por %p59, %p60
      %p62 = scmp.ne.s32.totalorder %s48, %s49
      %p63 = scmp.eq.s32.totalorder %s27, 1
      %p64 = por %p62, %p63
      %p66 = scmp.ne.s32.totalorder %s49, %s65
      %p67 = scmp.eq.s32.totalorder %s27, 0
      %p68 = por %p66, %p67
      %s70 = sadd.s32 %s69, 1
      %p73 = scmp.eq.s32.totalorder %s21, 1
      %p74 = scmp.ne.s32.totalorder %s69, %s71
      %p75 = scmp.eq.s32.totalorder %s21, 0
      %p76 = por %p74, %p75
      %p77 = scmp.ne.s32.totalorder %s69, %s71
      %p78 = scmp.eq.s32.totalorder %s26, 1
      %p79 = por %p77, %p78
      %p80 = scmp.ne.s32.totalorder %s71, %s72
      %p81 = scmp.eq.s32.totalorder %s26, 0
      %p82 = por %p80, %p81
      %p83 = scmp.ne.s32.totalorder %s71, %s72
      %p84 = scmp.eq.s32.totalorder %s27, 1
      %p85 = por %p83, %p84
      %p87 = scmp.ne.s32.totalorder %s72, %s86
      %p88 = scmp.eq.s32.totalorder %s27, 0
      %p89 = por %p87, %p88
      %s90 = ssub.s32 %s28, %s40
      %s91 = ssub.s32 %s29, %s36
      %s92 = sor.u32 %s90, %s91
      %p93 = scmp.eq.s32.totalorder %s92, 0
      %s95 = sadd.s32 %s94, 1
      %s96 = scalar_select %p93, %s94, %s95
      %p99 = pneg %p93
      %p100 = scmp.eq.s32.totalorder %s21, 1
      %p101 = por %p99, %p100
      %p102 = scmp.ne.s32.totalorder %s94, %s97
      %p103 = scmp.eq.s32.totalorder %s21, 0
      %p104 = por %p102, %p103
      %p105 = scmp.ne.s32.totalorder %s94, %s97
      %p106 = scmp.eq.s32.totalorder %s26, 1
      %p107 = por %p105, %p106
      %p108 = scmp.ne.s32.totalorder %s97, %s98
      %p109 = scmp.eq.s32.totalorder %s26, 0
      %p110 = por %p108, %p109
      %p111 = scmp.ne.s32.totalorder %s97, %s98
      %p112 = scmp.eq.s32.totalorder %s27, 1
      %p113 = por %p111, %p112
      %p115 = scmp.ne.s32.totalorder %s98, %s114
      %p116 = scmp.eq.s32.totalorder %s27, 0
      %p117 = por %p115, %p116
      %s118 = ssub.s32 %s28, %s40
      %s119 = ssub.s32 %s29, %s36
      %s120 = sor.u32 %s118, %s119
      %p121 = scmp.eq.s32.totalorder %s120, 0
      %s123 = sadd.s32 %s122, 1
      %s124 = scalar_select %p121, %s122, %s123
      %p127 = pneg %p121
      %p128 = scmp.eq.s32.totalorder %s21, 1
      %p129 = por %p127, %p128
      %p130 = scmp.ne.s32.totalorder %s122, %s125
      %p131 = scmp.eq.s32.totalorder %s21, 0
      %p132 = por %p130, %p131
      %p133 = scmp.ne.s32.totalorder %s122, %s125
      %p134 = scmp.eq.s32.totalorder %s26, 1
      %p135 = por %p133, %p134
      %p136 = scmp.ne.s32.totalorder %s125, %s126
      %p137 = scmp.eq.s32.totalorder %s26, 0
      %p138 = por %p136, %p137
      %p139 = scmp.ne.s32.totalorder %s125, %s126
      %p140 = scmp.eq.s32.totalorder %s27, 1
      %p141 = por %p139, %p140
      %p143 = scmp.ne.s32.totalorder %s126, %s142
      %p144 = scmp.eq.s32.totalorder %s27, 0
      %p145 = por %p143, %p144
      %s146 = ssub.s32 %s28, %s40
      %s147 = ssub.s32 %s29, %s36
      %s148 = sor.u32 %s146, %s147
      %p149 = scmp.eq.s32.totalorder %s148, 0
      %s151 = sadd.s32 %s150, 1
      %s152 = scalar_select %p149, %s150, %s151
      %p155 = pneg %p149
      %p156 = scmp.eq.s32.totalorder %s21, 1
      %p157 = por %p155, %p156
      %p158 = scmp.ne.s32.totalorder %s150, %s153
      %p159 = scmp.eq.s32.totalorder %s21, 0
      %p160 = por %p158, %p159
      %p161 = scmp.ne.s32.totalorder %s150, %s153
      %p162 = scmp.eq.s32.totalorder %s26, 1
      %p163 = por %p161, %p162
      %p164 = scmp.ne.s32.totalorder %s153, %s154
      %p165 = scmp.eq.s32.totalorder %s26, 0
      %p166 = por %p164, %p165
      %p167 = scmp.ne.s32.totalorder %s153, %s154
      %p168 = scmp.eq.s32.totalorder %s27, 1
      %p169 = por %p167, %p168
      %p171 = scmp.ne.s32.totalorder %s154, %s170
      %p172 = scmp.eq.s32.totalorder %s27, 0
      %p173 = por %p171, %p172
      %p174 = scmp.le.s32.totalorder 1, %s21
      %p175 = scmp.lt.s32.totalorder %s21, 3
      %p176 = pnand %p174, %p175
      %p177 = pneg %p176
      // Predicated region
      $region9: #{tpu_custom_call.1} parent=5 // pred_check
        _
      $region10: #{tpu_custom_call.1} parent=5 // pred_check_branch
        %179 = sbr.rel (%p176) target = $region12
      $region11: #{tpu_custom_call.1} parent=5 // pred_region
        %s180 = ssub.s32 %s21, 1
        // Predicated region
        $region13: #{tpu_custom_call.1} parent=11 // pred_check
          %p181 = pneg %p82
        $region14: #{tpu_custom_call.1} parent=11 // pred_check_branch
          %183 = sbr.rel (%p181) target = $region16
        $region15: #{tpu_custom_call.1} parent=11 // pred_region
          %s185 = ssub.s32 768, 768
          %186 = vsyncadd [#allocation6], %s185
          %s187 = sshll.u32 [#allocation5], 4
          %s188 = int_to_ptr.vmem [resolvable:$true] %s187
          %193 = dma.hbm_to_vmem [thread:$0]  %s1, 768, %s188, [#allocation6], 192, 192, 12
        $region16: #{tpu_custom_call.1} parent=11 // pred_fallthru
          _
      $region12: #{tpu_custom_call.1} parent=5 // pred_fallthru
        _
      %p194 = scmp.lt.s32.totalorder %s21, 2
      // Predicated region
      $region17: #{tpu_custom_call.1} parent=5 // pred_check
        %p195 = pneg %p194
      $region18: #{tpu_custom_call.1} parent=5 // pred_check_branch
        %197 = sbr.rel (%p195) target = $region20
      $region19: #{tpu_custom_call.1} parent=5 // pred_region
        // Predicated region
        $region21: #{tpu_custom_call.1} parent=19 // pred_check
          %p198 = pneg %p55
        $region22: #{tpu_custom_call.1} parent=19 // pred_check_branch
          %200 = sbr.rel (%p198) target = $region24
        $region23: #{tpu_custom_call.1} parent=19 // pred_region
          %s201 = sand.u32 %s45, 1
          %s202 = scalar_lea.sflag [#allocation3], %s201
          %s203 = sand.u32 %s45, 1
          %s204 = smul.addr %s203, 8
          %s205 = scalar_lea.vmem [#allocation2], %s204
          %s207 = ssub.s32 128, 128
          %208 = vsyncadd %s202, %s207
          %s209 = sadd.s32 %s29, %s28
          %s210 = smul.addr %s209, 128
          %s211 = scalar_lea.hbm %s0, %s210
          %s213 = sshll.u32 %s205, 4
          %s214 = int_to_ptr.vmem [resolvable:$true] %s213
          %216 = dma.hbm_to_vmem [thread:$0]  %s211, 128, %s214, %s202
        $region24: #{tpu_custom_call.1} parent=19 // pred_fallthru
          _
      $region20: #{tpu_custom_call.1} parent=5 // pred_fallthru
        _
      %p217 = scmp.le.s32.totalorder 1, %s21
      %p218 = scmp.lt.s32.totalorder %s21, 3
      %p219 = pnand %p217, %p218
      %p220 = pneg %p219
      // Predicated region
      $region25: #{tpu_custom_call.1} parent=5 // pred_check
        _
      $region26: #{tpu_custom_call.1} parent=5 // pred_check_branch
        %222 = sbr.rel (%p219) target = $region28
      $region27: #{tpu_custom_call.1} parent=5 // pred_region
        %s223 = ssub.s32 %s21, 1
        %s224 = sand.u32 %s48, 1
        %s225 = scalar_lea.sflag [#allocation3], %s224
        %s226 = sand.u32 %s48, 1
        %s227 = smul.addr %s226, 8
        %s228 = scalar_lea.vmem [#allocation2], %s227
        // Predicated region
        $region29: #{tpu_custom_call.1} parent=27 // pred_check
          %p229 = pneg %p61
        $region30: #{tpu_custom_call.1} parent=27 // pred_check_branch
          %231 = sbr.rel (%p229) target = $region32
        $region31: #{tpu_custom_call.1} parent=27 // pred_region
          %232 = dma.done %s225, 128
        $region32: #{tpu_custom_call.1} parent=27 // pred_fallthru
          _
        // Predicated region
        $region33: #{tpu_custom_call.1} parent=27 // pred_check
          %p233 = pneg %p82
        $region34: #{tpu_custom_call.1} parent=27 // pred_check_branch
          %235 = sbr.rel (%p233) target = $region36
        $region35: #{tpu_custom_call.1} parent=27 // pred_region
          %236 = dma.done [#allocation6], 768
        $region36: #{tpu_custom_call.1} parent=27 // pred_fallthru
          _
        %s237 = sand.u32 %s48, 1
        %s238 = scalar_lea.sflag [#allocation3], %s237
        %s239 = sand.u32 %s48, 1
        %s240 = smul.addr %s239, 8
        %s241 = scalar_lea.vmem [#allocation2], %s240
        %p242 = pneg %p61
        %p243 = pneg %p58
        %p244 = pneg %p82
        %p245 = pneg %p79
        %p246 = pneg %p110
        %p247 = pneg %p107
        %s248 = sand.u32 %s97, 1
        %s249 = scalar_lea.sflag [#allocation4], %s248
        %s250 = sand.u32 %s97, 1
        %s251 = smul.addr %s250, 32
        %s252 = scalar_lea.vmem [#allocation7], %s251
        %p253 = pneg %p138
        %p254 = pneg %p135
        %s255 = sand.u32 %s26, 1
        %s256 = scalar_lea.sflag [#allocation9], %s255
        %s257 = sand.u32 %s125, 1
        %s258 = smul.addr %s257, 32
        %s259 = scalar_lea.vmem [#allocation8], %s258
        %p260 = pneg %p166
        %p261 = pneg %p163
        %s262 = sand.u32 %s26, 1
        %s263 = scalar_lea.sflag [#allocation9], %s262
        %s264 = sand.u32 %s153, 1
        %s265 = smul.addr %s264, 32
        %s266 = scalar_lea.vmem [#allocation10], %s265
        %v268 = vld [vmem:[%s228] sm:$0xff]
        %v269 = vpack.c.bf16 %v268, %v268
        %v270 = vld [vmem:[#allocation5] sm:$0xff]
        %v271 = vld [vmem:[#allocation5 + $0x8] sm:$0xf]
        %v272 = vld [vmem:[#allocation5 + $0xc] sm:$0xff]
        %v273 = vld [vmem:[#allocation5 + $0x14] sm:$0xf]
        %v274 = vld [vmem:[#allocation5 + $0x18] sm:$0xff]
        %v275 = vld [vmem:[#allocation5 + $0x20] sm:$0xf]
        %v276 = vld [vmem:[#allocation5 + $0x24] sm:$0xff]
        %v277 = vld [vmem:[#allocation5 + $0x2c] sm:$0xf]
        %v286 = vunpack.c.l.b16 %v270
        %v287 = vunpack.c.h.b16 %v270
        %v288 = vunpack.c.l.b16 %v271
        %v289 = vunpack.c.l.b16 %v272
        %v290 = vunpack.c.h.b16 %v272
        %v291 = vunpack.c.l.b16 %v273
        %v292 = vunpack.c.l.b16 %v274
        %v293 = vunpack.c.h.b16 %v274
        %v294 = vunpack.c.l.b16 %v275
        %v295 = vunpack.c.l.b16 %v276
        %v296 = vunpack.c.h.b16 %v276
        %v297 = vunpack.c.l.b16 %v277
        %v298 = vpack.c.b16 %v289, %v286
        %v299 = vpack.c.b16 %v290, %v287
        %v300 = vpack.c.b16 %v291, %v288
        %v301 = vpack.c.b16 %v295, %v292
        %v302 = vpack.c.b16 %v296, %v293
        %v303 = vpack.c.b16 %v297, %v294
        %vm310 = vcmask 261120
        %v312 = vsel %vm310, %v269, 0
        %314 = vmatprep.subr.bf16.mxu0 %v299
        %315 = vmatpush1.bf16.msra.mxu0 %v298
        %316 = vmatprep.subr.bf16.mxu0 %v302
        %317 = vmatpush1.bf16.msra.mxu0 %v301
        %318 = vmatprep.subr.bf16.mxu0 0
        %319 = vmatpush1.bf16.msra.mxu0 0
        %320 = vmatprep.subr.bf16.mxu0 0
        %321 = vmatpush1.bf16.msra.mxu0 0
        %322 = vmatprep.subr.bf16.mxu0 0
        %323 = vmatpush1.bf16.msra.mxu0 0
        %324 = vmatprep.subr.bf16.mxu0 0
        %325 = vmatpush1.bf16.msra.mxu0 0
        %326 = vmatprep.subr.bf16.mxu0 0
        %327 = vmatpush1.bf16.msra.mxu0 0
        %328 = vmatprep.subr.bf16.mxu0 0
        %329 = vmatpush1.bf16.msra.mxu0 0
        %330 = vmatprep.subr.bf16.mxu0 0
        %331 = vmatpush1.bf16.msra.mxu0 0
        %332 = vmatprep.subr.bf16.mxu0 0
        %333 = vmatpush1.bf16.msra.mxu0 0
        %334 = vmatprep.subr.bf16.mxu0 0
        %335 = vmatpush1.bf16.msra.mxu0 0
        %336 = vmatprep.subr.bf16.mxu0 0
        %337 = vmatpush1.bf16.msra.mxu0 0
        %338 = vmatprep.subr.bf16.mxu0 0
        %339 = vmatpush1.bf16.msra.mxu0 0
        %340 = vmatprep.subr.bf16.mxu0 0
        %341 = vmatpush1.bf16.msra.mxu0 0
        %342 = vmatprep.subr.bf16.mxu0 0
        %343 = vmatpush1.bf16.msra.mxu0 0
        %344 = vmatprep.subr.bf16.mxu0 0
        %345 = vmatpush1.bf16.msra.mxu0 0
        %346 = vmatprep.mubr.bf16.mxu0 0
        %347 = vmatmul.mubr.bf16.gmra.mrb[0].mxu0 %v312
        %v348 = vpop.f32.mrb[0].mxu0
        %v349 = vadd.f32 0.0, %v348
        %v350 = vpop.f32.mrb[0].mxu0
        %v351 = vadd.f32 0.0, %v350
        %v352 = vpop.f32.mrb[0].mxu0
        %v353 = vpop.f32.mrb[0].mxu0
        %354 = vdwg.mxu0
        %355 = vmatprep.subr.bf16.mxu0 0
        %356 = vmatpush1.bf16.msra.mxu0 %v300
        %357 = vmatprep.subr.bf16.mxu0 0
        %358 = vmatpush1.bf16.msra.mxu0 %v303
        %359 = vmatprep.subr.bf16.mxu0 0
        %360 = vmatpush1.bf16.msra.mxu0 0
        %361 = vmatprep.subr.bf16.mxu0 0
        %362 = vmatpush1.bf16.msra.mxu0 0
        %363 = vmatprep.subr.bf16.mxu0 0
        %364 = vmatpush1.bf16.msra.mxu0 0
        %365 = vmatprep.subr.bf16.mxu0 0
        %366 = vmatpush1.bf16.msra.mxu0 0
        %367 = vmatprep.subr.bf16.mxu0 0
        %368 = vmatpush1.bf16.msra.mxu0 0
        %369 = vmatprep.subr.bf16.mxu0 0
        %370 = vmatpush1.bf16.msra.mxu0 0
        %371 = vmatprep.subr.bf16.mxu0 0
        %372 = vmatpush1.bf16.msra.mxu0 0
        %373 = vmatprep.subr.bf16.mxu0 0
        %374 = vmatpush1.bf16.msra.mxu0 0
        %375 = vmatprep.subr.bf16.mxu0 0
        %376 = vmatpush1.bf16.msra.mxu0 0
        %377 = vmatprep.subr.bf16.mxu0 0
        %378 = vmatpush1.bf16.msra.mxu0 0
        %379 = vmatprep.subr.bf16.mxu0 0
        %380 = vmatpush1.bf16.msra.mxu0 0
        %381 = vmatprep.subr.bf16.mxu0 0
        %382 = vmatpush1.bf16.msra.mxu0 0
        %383 = vmatprep.subr.bf16.mxu0 0
        %384 = vmatpush1.bf16.msra.mxu0 0
        %385 = vmatprep.subr.bf16.mxu0 0
        %386 = vmatpush1.bf16.msra.mxu0 0
        %387 = vmatprep.mubr.bf16.mxu0 0
        %388 = vmatmul.mubr.bf16.gmra.mrb[0].mxu0 %v312
        %v389 = vpop.f32.mrb[0].mxu0
        %v390 = vadd.f32 0.0, %v389
        %v391 = vpop.f32.mrb[0].mxu0
        %v392 = vpop.f32.mrb[0].mxu0
        %v393 = vpop.f32.mrb[0].mxu0
        %394 = vdwg.mxu0
        %v395 = vpack.c.bf16 %v349, %v349
        %v396 = vpack.c.bf16 %v351, %v351
        %v397 = vpack.c.bf16 %v390, %v390
        %vm398 = vcmask 125952
        %399 = vst.msk [vmem:[%s252] sm:$0xf] %vm398, %v395
        %400 = vst.msk [vmem:[%s259] sm:$0xf] %vm398, %v396
        %401 = vst.msk [vmem:[%s266] sm:$0xf] %vm398, %v397
        %v403 = vunpack.c.l.b16 %v395
        %v404 = vpack.c.b16 %v403, %v403
        %405 = vrot.lane.b32.xlu0 %v404, 112
        %v406 = vpop.permute.xlu0 %405
        %s408 = scalar_lea.vmem %s252, 4 [#allocation7]
        %409 = vst.msk [vmem:[%s408] sm:$0xf] %vm398, %v406
        %v411 = vunpack.c.l.b16 %v396
        %v412 = vpack.c.b16 %v411, %v411
        %413 = vrot.lane.b32.xlu0 %v412, 112
        %v414 = vpop.permute.xlu0 %413
        %s416 = scalar_lea.vmem %s259, 4 [#allocation8]
        %417 = vst.msk [vmem:[%s416] sm:$0xf] %vm398, %v414
        %v419 = vunpack.c.l.b16 %v397
        %v420 = vpack.c.b16 %v419, %v419
        %421 = vrot.lane.b32.xlu0 %v420, 112
        %v422 = vpop.permute.xlu0 %421
        %s424 = scalar_lea.vmem %s266, 4 [#allocation10]
        %425 = vst.msk [vmem:[%s424] sm:$0xf] %vm398, %v422
        %426 = vrot.lane.b32.xlu0 %v404, 96
        %v427 = vpop.permute.xlu0 %426
        %s429 = scalar_lea.vmem %s252, 8 [#allocation7]
        %430 = vst.msk [vmem:[%s429] sm:$0xf] %vm398, %v427
        %431 = vrot.lane.b32.xlu0 %v412, 96
        %v432 = vpop.permute.xlu0 %431
        %s434 = scalar_lea.vmem %s259, 8 [#allocation8]
        %435 = vst.msk [vmem:[%s434] sm:$0xf] %vm398, %v432
        %436 = vrot.lane.b32.xlu0 %v420, 96
        %v437 = vpop.permute.xlu0 %436
        %s439 = scalar_lea.vmem %s266, 8 [#allocation10]
        %440 = vst.msk [vmem:[%s439] sm:$0xf] %vm398, %v437
        %441 = vrot.lane.b32.xlu0 %v404, 80
        %v442 = vpop.permute.xlu0 %441
        %s444 = scalar_lea.vmem %s252, 12 [#allocation7]
        %445 = vst.msk [vmem:[%s444] sm:$0xf] %vm398, %v442
        %446 = vrot.lane.b32.xlu0 %v412, 80
        %v447 = vpop.permute.xlu0 %446
        %s449 = scalar_lea.vmem %s259, 12 [#allocation8]
        %450 = vst.msk [vmem:[%s449] sm:$0xf] %vm398, %v447
        %451 = vrot.lane.b32.xlu0 %v420, 80
        %v452 = vpop.permute.xlu0 %451
        %s454 = scalar_lea.vmem %s266, 12 [#allocation10]
        %455 = vst.msk [vmem:[%s454] sm:$0xf] %vm398, %v452
        %456 = vrot.lane.b32.xlu0 %v404, 64
        %v457 = vpop.permute.xlu0 %456
        %s459 = scalar_lea.vmem %s252, 16 [#allocation7]
        %460 = vst.msk [vmem:[%s459] sm:$0xf] %vm398, %v457
        %461 = vrot.lane.b32.xlu0 %v412, 64
        %v462 = vpop.permute.xlu0 %461
        %s464 = scalar_lea.vmem %s259, 16 [#allocation8]
        %465 = vst.msk [vmem:[%s464] sm:$0xf] %vm398, %v462
        %466 = vrot.lane.b32.xlu0 %v420, 64
        %v467 = vpop.permute.xlu0 %466
        %s469 = scalar_lea.vmem %s266, 16 [#allocation10]
        %470 = vst.msk [vmem:[%s469] sm:$0xf] %vm398, %v467
        %471 = vrot.lane.b32.xlu0 %v404, 48
        %v472 = vpop.permute.xlu0 %471
        %s474 = scalar_lea.vmem %s252, 20 [#allocation7]
        %475 = vst.msk [vmem:[%s474] sm:$0xf] %vm398, %v472
        %476 = vrot.lane.b32.xlu0 %v412, 48
        %v477 = vpop.permute.xlu0 %476
        %s479 = scalar_lea.vmem %s259, 20 [#allocation8]
        %480 = vst.msk [vmem:[%s479] sm:$0xf] %vm398, %v477
        %481 = vrot.lane.b32.xlu0 %v420, 48
        %v482 = vpop.permute.xlu0 %481
        %s484 = scalar_lea.vmem %s266, 20 [#allocation10]
        %485 = vst.msk [vmem:[%s484] sm:$0xf] %vm398, %v482
        %486 = vrot.lane.b32.xlu0 %v404, 32
        %v487 = vpop.permute.xlu0 %486
        %s489 = scalar_lea.vmem %s252, 24 [#allocation7]
        %490 = vst.msk [vmem:[%s489] sm:$0xf] %vm398, %v487
        %491 = vrot.lane.b32.xlu0 %v412, 32
        %v492 = vpop.permute.xlu0 %491
        %s494 = scalar_lea.vmem %s259, 24 [#allocation8]
        %495 = vst.msk [vmem:[%s494] sm:$0xf] %vm398, %v492
        %496 = vrot.lane.b32.xlu0 %v420, 32
        %v497 = vpop.permute.xlu0 %496
        %s499 = scalar_lea.vmem %s266, 24 [#allocation10]
        %500 = vst.msk [vmem:[%s499] sm:$0xf] %vm398, %v497
        %501 = vrot.lane.b32.xlu0 %v404, 16
        %v502 = vpop.permute.xlu0 %501
        %s504 = scalar_lea.vmem %s252, 28 [#allocation7]
        %505 = vst.msk [vmem:[%s504] sm:$0xf] %vm398, %v502
        %506 = vrot.lane.b32.xlu0 %v412, 16
        %v507 = vpop.permute.xlu0 %506
        %s509 = scalar_lea.vmem %s259, 28 [#allocation8]
        %510 = vst.msk [vmem:[%s509] sm:$0xf] %vm398, %v507
        %511 = vrot.lane.b32.xlu0 %v420, 16
        %v512 = vpop.permute.xlu0 %511
        %s514 = scalar_lea.vmem %s266, 28 [#allocation10]
        %515 = vst.msk [vmem:[%s514] sm:$0xf] %vm398, %v512
        %s516 = sand.u32 %s97, 1
        %s517 = scalar_lea.sflag [#allocation4], %s516
        %s518 = sand.u32 %s97, 1
        %s519 = smul.addr %s518, 32
        %s520 = scalar_lea.vmem [#allocation7], %s519
        %s521 = sand.u32 %s26, 1
        %s522 = scalar_lea.sflag [#allocation9], %s521
        %s523 = sand.u32 %s125, 1
        %s524 = smul.addr %s523, 32
        %s525 = scalar_lea.vmem [#allocation8], %s524
        %s526 = sand.u32 %s26, 1
        %s527 = scalar_lea.sflag [#allocation9], %s526
        %s528 = sand.u32 %s153, 1
        %s529 = smul.addr %s528, 32
        %s530 = scalar_lea.vmem [#allocation10], %s529
        // Predicated region
        $region37: #{tpu_custom_call.1} parent=27 // pred_check
          %p531 = pneg %p107
        $region38: #{tpu_custom_call.1} parent=27 // pred_check_branch
          %533 = sbr.rel (%p531) target = $region40
        $region39: #{tpu_custom_call.1} parent=27 // pred_region
          %s535 = ssub.s32 512, 512
          %536 = vsyncadd %s517, %s535
          %s537 = smul.addr %s30, 8
          %s538 = sadd.s32 %s31, %s537
          %s539 = smul.addr %s538, 64
          %s540 = scalar_lea.hbm %s2, %s539
          %s541 = sshll.u32 %s520, 4
          %s542 = int_to_ptr.vmem [resolvable:$true] %s541
          %547 = dma.vmem_to_hbm [thread:$0]  %s542, 512, %s540, %s517, 64, 64, 4
        $region40: #{tpu_custom_call.1} parent=27 // pred_fallthru
          _
        // Predicated region
        $region41: #{tpu_custom_call.1} parent=27 // pred_check
          %p548 = pneg %p135
        $region42: #{tpu_custom_call.1} parent=27 // pred_check_branch
          %550 = sbr.rel (%p548) target = $region44
        $region43: #{tpu_custom_call.1} parent=27 // pred_region
          %s552 = ssub.s32 512, 512
          %553 = vsyncadd %s522, %s552
          %s554 = smul.addr %s30, 8
          %s555 = sadd.s32 %s31, %s554
          %s556 = smul.addr %s555, 64
          %s557 = scalar_lea.hbm %s3, %s556
          %s558 = sshll.u32 %s525, 4
          %s559 = int_to_ptr.vmem [resolvable:$true] %s558
          %564 = dma.vmem_to_hbm [thread:$0]  %s559, 512, %s557, %s522, 64, 64, 4
        $region44: #{tpu_custom_call.1} parent=27 // pred_fallthru
          _
        // Predicated region
        $region45: #{tpu_custom_call.1} parent=27 // pred_check
          %p565 = pneg %p163
        $region46: #{tpu_custom_call.1} parent=27 // pred_check_branch
          %567 = sbr.rel (%p565) target = $region48
        $region47: #{tpu_custom_call.1} parent=27 // pred_region
          %s569 = ssub.s32 512, 512
          %570 = vsyncadd %s527, %s569
          %s571 = smul.addr %s30, 8
          %s572 = sadd.s32 %s31, %s571
          %s573 = smul.addr %s572, 64
          %s574 = scalar_lea.hbm %s4, %s573
          %s575 = sshll.u32 %s530, 4
          %s576 = int_to_ptr.vmem [resolvable:$true] %s575
          %581 = dma.vmem_to_hbm [thread:$0]  %s576, 512, %s574, %s527, 64, 64, 4
        $region48: #{tpu_custom_call.1} parent=27 // pred_fallthru
          _
      $region28: #{tpu_custom_call.1} parent=5 // pred_fallthru
        _
      %p582 = scmp.le.s32.totalorder 2, %s21
      // Predicated region
      $region49: #{tpu_custom_call.1} parent=5 // pred_check
        %p583 = pneg %p582
      $region50: #{tpu_custom_call.1} parent=5 // pred_check_branch
        %585 = sbr.rel (%p583) target = $region52
      $region51: #{tpu_custom_call.1} parent=5 // pred_region
        %s586 = ssub.s32 %s21, 2
        // Predicated region
        $region53: #{tpu_custom_call.1} parent=51 // pred_check
          %p587 = pneg %p113
        $region54: #{tpu_custom_call.1} parent=51 // pred_check_branch
          %589 = sbr.rel (%p587) target = $region56
        $region55: #{tpu_custom_call.1} parent=51 // pred_region
          %s590 = sand.u32 %s98, 1
          %s591 = scalar_lea.sflag [#allocation4], %s590
          %s592 = sand.u32 %s98, 1
          %s593 = smul.addr %s592, 32
          %s594 = scalar_lea.vmem [#allocation7], %s593
          %595 = dma.done %s591, 512
        $region56: #{tpu_custom_call.1} parent=51 // pred_fallthru
          _
        // Predicated region
        $region57: #{tpu_custom_call.1} parent=51 // pred_check
          %p596 = pneg %p141
        $region58: #{tpu_custom_call.1} parent=51 // pred_check_branch
          %598 = sbr.rel (%p596) target = $region60
        $region59: #{tpu_custom_call.1} parent=51 // pred_region
          %s599 = sand.u32 %s27, 1
          %s600 = scalar_lea.sflag [#allocation9], %s599
          %s601 = sand.u32 %s126, 1
          %s602 = smul.addr %s601, 32
          %s603 = scalar_lea.vmem [#allocation8], %s602
          %604 = dma.done %s600, 512
        $region60: #{tpu_custom_call.1} parent=51 // pred_fallthru
          _
        // Predicated region
        $region61: #{tpu_custom_call.1} parent=51 // pred_check
          %p605 = pneg %p169
        $region62: #{tpu_custom_call.1} parent=51 // pred_check_branch
          %607 = sbr.rel (%p605) target = $region64
        $region63: #{tpu_custom_call.1} parent=51 // pred_region
          %s608 = sand.u32 %s27, 1
          %s609 = scalar_lea.sflag [#allocation9], %s608
          %s610 = sand.u32 %s154, 1
          %s611 = smul.addr %s610, 32
          %s612 = scalar_lea.vmem [#allocation10], %s611
          %613 = dma.done %s609, 512
        $region64: #{tpu_custom_call.1} parent=51 // pred_fallthru
          _
      $region52: #{tpu_custom_call.1} parent=5 // pred_fallthru
        _
    $region6: #{tpu_custom_call.1} parent=1 // loop_footer
      %s25 = sadd.s32 1, %s21
    $region7: #{tpu_custom_call.1} parent=1 // loop_footer_branch
      %20 = sbr.rel target = $region3
    $region8: #{tpu_custom_call.1} parent=1 // loop_exit
      _
    %614 = vsyncpa [#allocation3], 1
    %s615 = scalar_lea.sflag [#allocation3], 1
    %616 = vsyncpa %s615, 1
    %617 = vsyncpa [#allocation6], 1
    %618 = vsyncpa [#allocation4], 1
    %s619 = scalar_lea.sflag [#allocation4], 1
    %620 = vsyncpa %s619, 1
    %621 = vsyncpa [#allocation9], 1
    %s622 = scalar_lea.sflag [#allocation9], 1
    %623 = vsyncpa %s622, 1

</llo_original>
